<compile_context>
chip_gen: v7x
topology: tpu7x:2x2x1
jax: 0.10.0
libtpu: 0.0.40
codegen_flags: <defaults>
</compile_context>

<pallas_src>
import functools

import jax
import jax.numpy as jnp
from jax.experimental import pallas as pl
from jax.experimental.pallas import tpu as pltpu

# TODO(synk): config.fcn_net_width is not given in the reference; use a small
# deterministic width schedule consistent with the module structure.
FCN_NET_WIDTH = [32, 64, 64, 16]
LANE = 128  # TPU lane width; hidden/output feature dims are zero-padded to this.


def _round_up(n, m):
    return ((n + m - 1) // m) * m


def _fcn_fused_kernel(x_ref, w_ref, b_ref, o_ref, *, n_layers, d_in):
    """Whole MLP on one batch tile; activations never leave VMEM/vregs.

    x_ref: (tb, d_in) f32       -- unpadded input features
    w_ref: (L, 128, 128) bf16   -- stacked, zero-padded weights (resident)
    b_ref: (L, 1, 128) f32      -- stacked, zero-padded biases  (resident)
    o_ref: (tb, 128) f32        -- lane-dense padded output
    """
    h = x_ref[...]  # f32
    for i in range(n_layers):
        if i == 0:
            w = w_ref[0, :d_in, :]          # (d_in, 128) bf16, static slice
        else:
            w = w_ref[i]                    # (128, 128) bf16
        b = b_ref[i]                        # (1, 128) f32
        # bf16 MXU inputs, f32 accumulation; bias/ReLU stay on the f32 VPU path.
        h = jnp.dot(h.astype(jnp.bfloat16), w,
                    preferred_element_type=jnp.float32) + b
        if i != n_layers - 1:
            h = jnp.maximum(h, 0.0)
    o_ref[...] = h.astype(o_ref.dtype)


def init_fcn_params(key, widths):
    """nn.Linear-style init (uniform(-1/sqrt(in), 1/sqrt(in))), stored
    pre-transposed as (d_in, d_out), zero-padded to 128 lanes, stacked across
    layers, weights cast to bf16.

    Zero padding is exact: padded weight rows/cols and bias lanes are 0 and
    ReLU(0)=0, so padded lanes stay 0 through every layer.
    """
    n_layers = len(widths) - 1
    f_pad = _round_up(max(widths), LANE)  # 128 for this config
    w_stack = jnp.zeros((n_layers, f_pad, f_pad), jnp.float32)
    b_stack = jnp.zeros((n_layers, 1, f_pad), jnp.float32)
    for i in range(n_layers):
        d_in, d_out = widths[i], widths[i + 1]
        key, kw, kb = jax.random.split(key, 3)
        bound = 1.0 / (d_in ** 0.5)
        w = jax.random.uniform(kw, (d_in, d_out), jnp.float32, -bound, bound)
        b = jax.random.uniform(kb, (1, d_out), jnp.float32, -bound, bound)
        w_stack = w_stack.at[i, :d_in, :d_out].set(w)
        b_stack = b_stack.at[i, :, :d_out].set(b)
    return w_stack.astype(jnp.bfloat16), b_stack


@jax.jit
def fcn_net_forward(x, w_stack, b_stack):
    """Forward pass of FCN_net: Linear -> ReLU -> ... -> Linear (no final ReLU),
    fused into one Pallas kernel."""
    B, d_in = x.shape
    n_layers = w_stack.shape[0]
    f_pad = w_stack.shape[2]
    d_out = FCN_NET_WIDTH[-1]

    # Batch tiling: per-step overhead dominates (tiny matmuls), so use the
    # largest tile that makes sense, but prefer >= 2 tiles when B allows so the
    # "parallel" axis shards across v7x's two TensorCores.
    tb = min(_round_up(B, 8), 1024)
    if pl.cdiv(B, tb) < 2 and B >= 16:
        tb = _round_up(pl.cdiv(B, 2), 8)
    grid = (pl.cdiv(B, tb),)  # ragged last block handled by Pallas (masked)

    kernel = functools.partial(_fcn_fused_kernel, n_layers=n_layers, d_in=d_in)
    out = pl.pallas_call(
        kernel,
        out_shape=jax.ShapeDtypeStruct((B, f_pad), x.dtype),
        grid=grid,
        in_specs=[
            # x unpadded: last dim equals the full array dim -> legal block.
            pl.BlockSpec((tb, d_in), lambda i: (i, 0)),
            # Stacked weights/biases: full blocks, resident across the grid.
            pl.BlockSpec(w_stack.shape, lambda i: (0, 0, 0)),
            pl.BlockSpec(b_stack.shape, lambda i: (0, 0, 0)),
        ],
        out_specs=pl.BlockSpec((tb, f_pad), lambda i: (i, 0)),
        compiler_params=pltpu.CompilerParams(
            dimension_semantics=("parallel",)  # shard batch tiles across TCs
        ),
    )(x, w_stack, b_stack)

    # Undo lane padding (output rows already match B via masked boundary block).
    return out[:, :d_out]


def fcn_net_reference(x, w_stack, b_stack, widths=FCN_NET_WIDTH):
    """Pure-JAX reference: same bf16 weights / bf16 matmul inputs, f32 accumulate."""
    n_layers = len(widths) - 1
    h = x
    for i in range(n_layers):
        k = widths[0] if i == 0 else w_stack.shape[1]
        w = w_stack[i, :k, :].astype(jnp.float32)
        h = jnp.dot(h.astype(jnp.bfloat16).astype(jnp.float32), w) + b_stack[i]
        if i != n_layers - 1:
            h = jnp.maximum(h, 0.0)
    return h[:, : widths[-1]]


if __name__ == "__main__":
    key = jax.random.PRNGKey(0)
    key, kx = jax.random.split(key)

    batch = 8
    x = jax.random.normal(kx, (batch, FCN_NET_WIDTH[0]), dtype=jnp.float32)
    w_stack, b_stack = init_fcn_params(key, FCN_NET_WIDTH)

    y = fcn_net_forward(x, w_stack, b_stack)
    y = jax.block_until_ready(y)

    y_ref = fcn_net_reference(x, w_stack, b_stack)
    assert y.shape == (batch, FCN_NET_WIDTH[-1])
    assert jnp.allclose(y, y_ref, atol=1e-3, rtol=1e-3), "Pallas output mismatch"

    print("KERNEL_OK")
</pallas_src>

<mosaic_0001>
module attributes {stable_mosaic.version = 11 : i64} {
  func.func @_fcn_fused_kernel(%arg0: i32, %arg1: memref<8x32xf32, #tpu.memory_space<vmem>>, %arg2: memref<3x128x128xbf16, #tpu.memory_space<vmem>>, %arg3: memref<3x1x128xf32, #tpu.memory_space<vmem>>, %arg4: memref<8x128xf32, #tpu.memory_space<vmem>>) attributes {dimension_semantics = [#tpu.dimension_semantics<parallel>], iteration_bounds = array<i64: 1>, scalar_prefetch = 0 : i64, scratch_operands = 0 : i64, tpu.core_type = #tpu.core_type<tc>, window_params = [{transform_indices = @transform_0, window_bounds = array<i64: 8, 32>}, {pipeline_mode = #tpu.pipeline_mode<synchronous>, transform_indices = @transform_1, window_bounds = array<i64: 3, 128, 128>}, {pipeline_mode = #tpu.pipeline_mode<synchronous>, transform_indices = @transform_2, window_bounds = array<i64: 3, 1, 128>}, {transform_indices = @transform_3, window_bounds = array<i64: 8, 128>}]} {
    %c0 = arith.constant 0 : index
    %c0_0 = arith.constant 0 : index
    %0 = vector.load %arg1[%c0, %c0_0] : memref<8x32xf32, #tpu.memory_space<vmem>>, vector<8x32xf32>
    %c0_1 = arith.constant 0 : index
    %c0_2 = arith.constant 0 : index
    %c0_3 = arith.constant 0 : index
    %1 = vector.load %arg2[%c0_1, %c0_2, %c0_3] : memref<3x128x128xbf16, #tpu.memory_space<vmem>>, vector<1x32x128xbf16>
    %2 = vector.shape_cast %1 : vector<1x32x128xbf16> to vector<32x128xbf16>
    %c0_4 = arith.constant 0 : index
    %c0_5 = arith.constant 0 : index
    %c0_6 = arith.constant 0 : index
    %3 = vector.load %arg3[%c0_4, %c0_5, %c0_6] : memref<3x1x128xf32, #tpu.memory_space<vmem>>, vector<1x1x128xf32>
    %4 = vector.shape_cast %3 : vector<1x1x128xf32> to vector<1x128xf32>
    %5 = arith.truncf %0 : vector<8x32xf32> to vector<8x32xbf16>
    %cst = arith.constant dense<0.000000e+00> : vector<8x128xf32>
    %6 = tpu.matmul %5, %2, %cst {dimension_numbers = #tpu.dot_dimension_numbers<[1], [0], [0], [1], [0, 0, 1, 1], [], []>} : vector<8x32xbf16>, vector<32x128xbf16>, vector<8x128xf32> -> vector<8x128xf32>
    %7 = vector.broadcast %4 : vector<1x128xf32> to vector<8x128xf32>
    %8 = arith.addf %6, %7 : vector<8x128xf32>
    %cst_7 = arith.constant 0.000000e+00 : f32
    %9 = vector.broadcast %cst_7 : f32 to vector<8x128xf32>
    %10 = arith.maximumf %8, %9 : vector<8x128xf32>
    %c1 = arith.constant 1 : index
    %c0_8 = arith.constant 0 : index
    %c0_9 = arith.constant 0 : index
    %11 = vector.load %arg2[%c1, %c0_8, %c0_9] : memref<3x128x128xbf16, #tpu.memory_space<vmem>>, vector<1x128x128xbf16>
    %12 = vector.shape_cast %11 : vector<1x128x128xbf16> to vector<128x128xbf16>
    %c1_10 = arith.constant 1 : index
    %c0_11 = arith.constant 0 : index
    %c0_12 = arith.constant 0 : index
    %13 = vector.load %arg3[%c1_10, %c0_11, %c0_12] : memref<3x1x128xf32, #tpu.memory_space<vmem>>, vector<1x1x128xf32>
    %14 = vector.shape_cast %13 : vector<1x1x128xf32> to vector<1x128xf32>
    %15 = arith.truncf %10 : vector<8x128xf32> to vector<8x128xbf16>
    %cst_13 = arith.constant dense<0.000000e+00> : vector<8x128xf32>
    %16 = tpu.matmul %15, %12, %cst_13 {dimension_numbers = #tpu.dot_dimension_numbers<[1], [0], [0], [1], [0, 0, 1, 1], [], []>} : vector<8x128xbf16>, vector<128x128xbf16>, vector<8x128xf32> -> vector<8x128xf32>
    %17 = vector.broadcast %14 : vector<1x128xf32> to vector<8x128xf32>
    %18 = arith.addf %16, %17 : vector<8x128xf32>
    %cst_14 = arith.constant 0.000000e+00 : f32
    %19 = vector.broadcast %cst_14 : f32 to vector<8x128xf32>
    %20 = arith.maximumf %18, %19 : vector<8x128xf32>
    %c2 = arith.constant 2 : index
    %c0_15 = arith.constant 0 : index
    %c0_16 = arith.constant 0 : index
    %21 = vector.load %arg2[%c2, %c0_15, %c0_16] : memref<3x128x128xbf16, #tpu.memory_space<vmem>>, vector<1x128x128xbf16>
    %22 = vector.shape_cast %21 : vector<1x128x128xbf16> to vector<128x128xbf16>
    %c2_17 = arith.constant 2 : index
    %c0_18 = arith.constant 0 : index
    %c0_19 = arith.constant 0 : index
    %23 = vector.load %arg3[%c2_17, %c0_18, %c0_19] : memref<3x1x128xf32, #tpu.memory_space<vmem>>, vector<1x1x128xf32>
    %24 = vector.shape_cast %23 : vector<1x1x128xf32> to vector<1x128xf32>
    %25 = arith.truncf %20 : vector<8x128xf32> to vector<8x128xbf16>
    %cst_20 = arith.constant dense<0.000000e+00> : vector<8x128xf32>
    %26 = tpu.matmul %25, %22, %cst_20 {dimension_numbers = #tpu.dot_dimension_numbers<[1], [0], [0], [1], [0, 0, 1, 1], [], []>} : vector<8x128xbf16>, vector<128x128xbf16>, vector<8x128xf32> -> vector<8x128xf32>
    %27 = vector.broadcast %24 : vector<1x128xf32> to vector<8x128xf32>
    %28 = arith.addf %26, %27 : vector<8x128xf32>
    %c0_21 = arith.constant 0 : index
    %c0_22 = arith.constant 0 : index
    %29 = vector.load %arg4[%c0_21, %c0_22] : memref<8x128xf32, #tpu.memory_space<vmem>>, vector<8x128xf32>
    tpu.vector_store %arg4[%c0_21, %c0_22], %28 {strides = array<i32>} : memref<8x128xf32, #tpu.memory_space<vmem>>, vector<8x128xf32>,
    return
  }
  func.func @transform_0(%arg0: i32) -> (i32, i32) {
    %c0_i32 = arith.constant 0 : i32
    %c0_i32_0 = arith.constant 0 : i32
    return %arg0, %c0_i32 : i32, i32
  }
  func.func @transform_1(%arg0: i32) -> (i32, i32, i32) {
    %c0_i32 = arith.constant 0 : i32
    %c0_i32_0 = arith.constant 0 : i32
    %c0_i32_1 = arith.constant 0 : i32
    %c0_i32_2 = arith.constant 0 : i32
    return %c0_i32, %c0_i32_0, %c0_i32_1 : i32, i32, i32
  }
  func.func @transform_2(%arg0: i32) -> (i32, i32, i32) {
    %c0_i32 = arith.constant 0 : i32
    %c0_i32_0 = arith.constant 0 : i32
    %c0_i32_1 = arith.constant 0 : i32
    %c0_i32_2 = arith.constant 0 : i32
    return %c0_i32, %c0_i32_0, %c0_i32_1 : i32, i32, i32
  }
  func.func @transform_3(%arg0: i32) -> (i32, i32) {
    %c0_i32 = arith.constant 0 : i32
    %c0_i32_0 = arith.constant 0 : i32
    return %arg0, %c0_i32 : i32, i32
  }
}

</mosaic_0001>

<llo_original>
// kernel: fcn_net_forward.1
$region0: #{fcn_net_forward.1}
  #allocation0 [shape = 'u32[]', space=smem, size = 0x4, offset = 0x4, fixed_abs, tag = 'smem constant byte address 0x4 - core index']
  #allocation1 [shape = 'u32[144,128]{1,0:T(1,128)}', space=vmem, size = 0x12000, scoped, tag = 'internal scratch']
  %s0 = inlined_call_operand.hbm [shape: f32[8,32], index: 0, kind: input, shape index: {}]
  %s1 = inlined_call_operand.hbm [shape: bf16[3,128,128], index: 1, kind: input, shape index: {}]
  %s2 = inlined_call_operand.vmem [shape: f32[3,1,128], index: 2, kind: input, shape index: {}]
  %s3 = inlined_call_operand.hbm [shape: f32[8,128], index: 3, kind: output, shape index: {}]
  %s4 = sld [smem:[#allocation0]]
  $region30: #{fcn_net_forward.1} parent=0
    _
  %s6 = ssub.s32 1, %s4
  %s7 = scalar_select 0, %s6, %s4
  $region1: #{fcn_net_forward.1} parent=0
    #allocation2 [shape = 'u8[4096]{0}', space=vmem, size = 0x1000, scoped, tag = 'input window, operand 0, single buffered']
    #allocation3 [shape = 's32[1]{0}', space=sflag, size = 0x4, scoped, tag = 'scoped memory for fcn_net_forward.1']
    #allocation4 [shape = 's32[1]{0}', space=sflag, size = 0x4, scoped, tag = 'scoped memory for fcn_net_forward.1']
    #allocation5 [shape = 'u8[98304]{0}', space=vmem, size = 0x18000, scoped, tag = 'input window, operand 1, single buffered']
    #allocation6 [shape = 's32[1]{0}', space=sflag, size = 0x4, scoped, tag = 'scoped memory for fcn_net_forward.1']
    #allocation7 [shape = 'u8[4096]{0}', space=vmem, size = 0x1000, scoped, tag = 'output window, operand 0, single buffered']
    %8 = vsyncpa [#allocation3], 0
    %9 = vsyncpa [#allocation6], 0
    %10 = vsyncpa [#allocation4], 0
    // Predicated region
    $region2: #{fcn_net_forward.1} parent=1 // pred_check
      _
    $region3: #{fcn_net_forward.1} parent=1 // pred_check_branch
      %12 = sbr.rel (0) target = $region5
    $region4: #{fcn_net_forward.1} parent=1 // pred_region
      %s14 = ssub.s32 128, 128
      %15 = vsyncadd [#allocation3], %s14
      %s17 = sshll.u32 [#allocation2], 4
      %s18 = int_to_ptr.vmem [resolvable:$true] %s17
      %20 = dma.hbm_to_vmem [thread:$0]  %s0, 128, %s18, [#allocation3]
    $region5: #{fcn_net_forward.1} parent=1 // pred_fallthru
      _
    // Predicated region
    $region6: #{fcn_net_forward.1} parent=1 // pred_check
      _
    $region7: #{fcn_net_forward.1} parent=1 // pred_check_branch
      %22 = sbr.rel (0) target = $region9
    $region8: #{fcn_net_forward.1} parent=1 // pred_region
      %s24 = ssub.s32 3072, 3072
      %25 = vsyncadd [#allocation6], %s24
      %s26 = sshll.u32 [#allocation5], 4
      %s27 = int_to_ptr.vmem [resolvable:$true] %s26
      %32 = dma.hbm_to_vmem [thread:$0]  %s1, 3072, %s27, [#allocation6], 64, 64, 4
    $region9: #{fcn_net_forward.1} parent=1 // pred_fallthru
      _
    // Predicated region
    $region10: #{fcn_net_forward.1} parent=1 // pred_check
      _
    $region11: #{fcn_net_forward.1} parent=1 // pred_check_branch
      %34 = sbr.rel (0) target = $region13
    $region12: #{fcn_net_forward.1} parent=1 // pred_region
      _
    $region13: #{fcn_net_forward.1} parent=1 // pred_fallthru
      _
    // Predicated region
    $region14: #{fcn_net_forward.1} parent=1 // pred_check
      _
    $region15: #{fcn_net_forward.1} parent=1 // pred_check_branch
      %36 = sbr.rel (0) target = $region17
    $region16: #{fcn_net_forward.1} parent=1 // pred_region
      %37 = dma.done [#allocation3], 128
    $region17: #{fcn_net_forward.1} parent=1 // pred_fallthru
      _
    // Predicated region
    $region18: #{fcn_net_forward.1} parent=1 // pred_check
      _
    $region19: #{fcn_net_forward.1} parent=1 // pred_check_branch
      %39 = sbr.rel (0) target = $region21
    $region20: #{fcn_net_forward.1} parent=1 // pred_region
      %40 = dma.done [#allocation6], 3072
    $region21: #{fcn_net_forward.1} parent=1 // pred_fallthru
      _
    %v42 = vld [vmem:[#allocation2] sm:$0xff]
    %v43 = vld [vmem:[#allocation5] sm:$0xf]
    %v44 = vld [vmem:[#allocation5 + $0x4] sm:$0xf]
    %v45 = vld [vmem:[#allocation5 + $0x8] sm:$0xf]
    %v46 = vld [vmem:[#allocation5 + $0xc] sm:$0xf]
    %v47 = vld [vmem:[%s2] sm:$0x1]
    %v48 = vpack.c.bf16 %v42, %v42
    %v50 = vlaneseq
    %v51 = vshrl.u32 %v50, 7
    %v52 = vsub.s32 0, %v51
    %v53 = vrot.slane %v47, %v52
    %v59 = vunpack.c.l.b16 %v43
    %v60 = vunpack.c.l.b16 %v44
    %v61 = vunpack.c.l.b16 %v45
    %v62 = vunpack.c.l.b16 %v46
    %v63 = vpack.c.b16 %v60, %v59
    %v64 = vpack.c.b16 %v62, %v61
    %vm67 = vcmask 261120
    %v69 = vsel %vm67, %v48, 0
    %71 = vmatprep.subr.bf16.mxu0 0
    %72 = vmatpush1.bf16.msra.mxu0 %v63
    %73 = vmatprep.subr.bf16.mxu0 0
    %74 = vmatpush1.bf16.msra.mxu0 %v64
    %75 = vmatprep.subr.bf16.mxu0 0
    %76 = vmatpush1.bf16.msra.mxu0 0
    %77 = vmatprep.subr.bf16.mxu0 0
    %78 = vmatpush1.bf16.msra.mxu0 0
    %79 = vmatprep.subr.bf16.mxu0 0
    %80 = vmatpush1.bf16.msra.mxu0 0
    %81 = vmatprep.subr.bf16.mxu0 0
    %82 = vmatpush1.bf16.msra.mxu0 0
    %83 = vmatprep.subr.bf16.mxu0 0
    %84 = vmatpush1.bf16.msra.mxu0 0
    %85 = vmatprep.subr.bf16.mxu0 0
    %86 = vmatpush1.bf16.msra.mxu0 0
    %87 = vmatprep.subr.bf16.mxu0 0
    %88 = vmatpush1.bf16.msra.mxu0 0
    %89 = vmatprep.subr.bf16.mxu0 0
    %90 = vmatpush1.bf16.msra.mxu0 0
    %91 = vmatprep.subr.bf16.mxu0 0
    %92 = vmatpush1.bf16.msra.mxu0 0
    %93 = vmatprep.subr.bf16.mxu0 0
    %94 = vmatpush1.bf16.msra.mxu0 0
    %95 = vmatprep.subr.bf16.mxu0 0
    %96 = vmatpush1.bf16.msra.mxu0 0
    %97 = vmatprep.subr.bf16.mxu0 0
    %98 = vmatpush1.bf16.msra.mxu0 0
    %99 = vmatprep.subr.bf16.mxu0 0
    %100 = vmatpush1.bf16.msra.mxu0 0
    %101 = vmatprep.subr.bf16.mxu0 0
    %102 = vmatpush1.bf16.msra.mxu0 0
    %103 = vmatprep.mubr.bf16.mxu0 0
    %104 = vmatmul.mubr.bf16.gmra.mrb[0].mxu0 %v69
    %v105 = vpop.f32.mrb[0].mxu0
    %v106 = vadd.f32 %v53, %v105
    %v107 = vpop.f32.mrb[0].mxu0
    %v108 = vpop.f32.mrb[0].mxu0
    %v109 = vpop.f32.mrb[0].mxu0
    %110 = vdwg.mxu0
    %v111 = vmax.f32 %v106, 0.0
    %s112 = scalar_lea.vmem [#allocation5], 64
    %v113 = vld [vmem:[%s112] sm:$0xf]
    %v114 = vld [vmem:[%s112 + $0x4] sm:$0xf]
    %v115 = vld [vmem:[%s112 + $0x8] sm:$0xf]
    %v116 = vld [vmem:[%s112 + $0xc] sm:$0xf]
    %v117 = vld [vmem:[%s112 + $0x10] sm:$0xf]
    %v118 = vld [vmem:[%s112 + $0x14] sm:$0xf]
    %v119 = vld [vmem:[%s112 + $0x18] sm:$0xf]
    %v120 = vld [vmem:[%s112 + $0x1c] sm:$0xf]
    %v121 = vld [vmem:[%s112 + $0x20] sm:$0xf]
    %v122 = vld [vmem:[%s112 + $0x24] sm:$0xf]
    %v123 = vld [vmem:[%s112 + $0x28] sm:$0xf]
    %v124 = vld [vmem:[%s112 + $0x2c] sm:$0xf]
    %v125 = vld [vmem:[%s112 + $0x30] sm:$0xf]
    %v126 = vld [vmem:[%s112 + $0x34] sm:$0xf]
    %v127 = vld [vmem:[%s112 + $0x38] sm:$0xf]
    %v128 = vld [vmem:[%s112 + $0x3c] sm:$0xf]
    %s129 = scalar_lea.vmem %s2, 1
    %v130 = vld [vmem:[%s129] sm:$0x1]
    %v131 = vpack.c.bf16 %v111, %v111
    %v133 = vlaneseq
    %v134 = vshrl.u32 %v133, 7
    %v135 = vsub.s32 0, %v134
    %v136 = vrot.slane %v130, %v135
    %v154 = vunpack.c.l.b16 %v113
    %v155 = vunpack.c.l.b16 %v114
    %v156 = vunpack.c.l.b16 %v115
    %v157 = vunpack.c.l.b16 %v116
    %v158 = vunpack.c.l.b16 %v117
    %v159 = vunpack.c.l.b16 %v118
    %v160 = vunpack.c.l.b16 %v119
    %v161 = vunpack.c.l.b16 %v120
    %v162 = vunpack.c.l.b16 %v121
    %v163 = vunpack.c.l.b16 %v122
    %v164 = vunpack.c.l.b16 %v123
    %v165 = vunpack.c.l.b16 %v124
    %v166 = vunpack.c.l.b16 %v125
    %v167 = vunpack.c.l.b16 %v126
    %v168 = vunpack.c.l.b16 %v127
    %v169 = vunpack.c.l.b16 %v128
    %v170 = vpack.c.b16 %v155, %v154
    %v171 = vpack.c.b16 %v157, %v156
    %v172 = vpack.c.b16 %v159, %v158
    %v173 = vpack.c.b16 %v161, %v160
    %v174 = vpack.c.b16 %v163, %v162
    %v175 = vpack.c.b16 %v165, %v164
    %v176 = vpack.c.b16 %v167, %v166
    %v177 = vpack.c.b16 %v169, %v168
    %186 = vmatprep.subr.bf16.mxu0 0
    %187 = vmatpush1.bf16.msra.mxu0 %v170
    %188 = vmatprep.subr.bf16.mxu0 0
    %189 = vmatpush1.bf16.msra.mxu0 %v171
    %190 = vmatprep.subr.bf16.mxu0 0
    %191 = vmatpush1.bf16.msra.mxu0 %v172
    %192 = vmatprep.subr.bf16.mxu0 0
    %193 = vmatpush1.bf16.msra.mxu0 %v173
    %194 = vmatprep.subr.bf16.mxu0 0
    %195 = vmatpush1.bf16.msra.mxu0 %v174
    %196 = vmatprep.subr.bf16.mxu0 0
    %197 = vmatpush1.bf16.msra.mxu0 %v175
    %198 = vmatprep.subr.bf16.mxu0 0
    %199 = vmatpush1.bf16.msra.mxu0 %v176
    %200 = vmatprep.subr.bf16.mxu0 0
    %201 = vmatpush1.bf16.msra.mxu0 %v177
    %202 = vmatprep.subr.bf16.mxu0 0
    %203 = vmatpush1.bf16.msra.mxu0 0
    %204 = vmatprep.subr.bf16.mxu0 0
    %205 = vmatpush1.bf16.msra.mxu0 0
    %206 = vmatprep.subr.bf16.mxu0 0
    %207 = vmatpush1.bf16.msra.mxu0 0
    %208 = vmatprep.subr.bf16.mxu0 0
    %209 = vmatpush1.bf16.msra.mxu0 0
    %210 = vmatprep.subr.bf16.mxu0 0
    %211 = vmatpush1.bf16.msra.mxu0 0
    %212 = vmatprep.subr.bf16.mxu0 0
    %213 = vmatpush1.bf16.msra.mxu0 0
    %214 = vmatprep.subr.bf16.mxu0 0
    %215 = vmatpush1.bf16.msra.mxu0 0
    %216 = vmatprep.subr.bf16.mxu0 0
    %217 = vmatpush1.bf16.msra.mxu0 0
    %218 = vmatprep.mubr.bf16.mxu0 0
    %219 = vmatmul.mubr.bf16.gmra.mrb[0].mxu0 %v131
    %v220 = vpop.f32.mrb[0].mxu0
    %v221 = vadd.f32 %v136, %v220
    %v222 = vpop.f32.mrb[0].mxu0
    %v223 = vpop.f32.mrb[0].mxu0
    %v224 = vpop.f32.mrb[0].mxu0
    %225 = vdwg.mxu0
    %v226 = vmax.f32 %v221, 0.0
    %s227 = scalar_lea.vmem [#allocation5], 128
    %v228 = vld [vmem:[%s227] sm:$0xf]
    %v229 = vld [vmem:[%s227 + $0x4] sm:$0xf]
    %v230 = vld [vmem:[%s227 + $0x8] sm:$0xf]
    %v231 = vld [vmem:[%s227 + $0xc] sm:$0xf]
    %v232 = vld [vmem:[%s227 + $0x10] sm:$0xf]
    %v233 = vld [vmem:[%s227 + $0x14] sm:$0xf]
    %v234 = vld [vmem:[%s227 + $0x18] sm:$0xf]
    %v235 = vld [vmem:[%s227 + $0x1c] sm:$0xf]
    %v236 = vld [vmem:[%s227 + $0x20] sm:$0xf]
    %v237 = vld [vmem:[%s227 + $0x24] sm:$0xf]
    %v238 = vld [vmem:[%s227 + $0x28] sm:$0xf]
    %v239 = vld [vmem:[%s227 + $0x2c] sm:$0xf]
    %v240 = vld [vmem:[%s227 + $0x30] sm:$0xf]
    %v241 = vld [vmem:[%s227 + $0x34] sm:$0xf]
    %v242 = vld [vmem:[%s227 + $0x38] sm:$0xf]
    %v243 = vld [vmem:[%s227 + $0x3c] sm:$0xf]
    %s244 = scalar_lea.vmem %s2, 2
    %v245 = vld [vmem:[%s244] sm:$0x1]
    %v246 = vpack.c.bf16 %v226, %v226
    %v248 = vlaneseq
    %v249 = vshrl.u32 %v248, 7
    %v250 = vsub.s32 0, %v249
    %v251 = vrot.slane %v245, %v250
    %v269 = vunpack.c.l.b16 %v228
    %v270 = vunpack.c.l.b16 %v229
    %v271 = vunpack.c.l.b16 %v230
    %v272 = vunpack.c.l.b16 %v231
    %v273 = vunpack.c.l.b16 %v232
    %v274 = vunpack.c.l.b16 %v233
    %v275 = vunpack.c.l.b16 %v234
    %v276 = vunpack.c.l.b16 %v235
    %v277 = vunpack.c.l.b16 %v236
    %v278 = vunpack.c.l.b16 %v237
    %v279 = vunpack.c.l.b16 %v238
    %v280 = vunpack.c.l.b16 %v239
    %v281 = vunpack.c.l.b16 %v240
    %v282 = vunpack.c.l.b16 %v241
    %v283 = vunpack.c.l.b16 %v242
    %v284 = vunpack.c.l.b16 %v243
    %v285 = vpack.c.b16 %v270, %v269
    %v286 = vpack.c.b16 %v272, %v271
    %v287 = vpack.c.b16 %v274, %v273
    %v288 = vpack.c.b16 %v276, %v275
    %v289 = vpack.c.b16 %v278, %v277
    %v290 = vpack.c.b16 %v280, %v279
    %v291 = vpack.c.b16 %v282, %v281
    %v292 = vpack.c.b16 %v284, %v283
    %301 = vmatprep.subr.bf16.mxu0 0
    %302 = vmatpush1.bf16.msra.mxu0 %v285
    %303 = vmatprep.subr.bf16.mxu0 0
    %304 = vmatpush1.bf16.msra.mxu0 %v286
    %305 = vmatprep.subr.bf16.mxu0 0
    %306 = vmatpush1.bf16.msra.mxu0 %v287
    %307 = vmatprep.subr.bf16.mxu0 0
    %308 = vmatpush1.bf16.msra.mxu0 %v288
    %309 = vmatprep.subr.bf16.mxu0 0
    %310 = vmatpush1.bf16.msra.mxu0 %v289
    %311 = vmatprep.subr.bf16.mxu0 0
    %312 = vmatpush1.bf16.msra.mxu0 %v290
    %313 = vmatprep.subr.bf16.mxu0 0
    %314 = vmatpush1.bf16.msra.mxu0 %v291
    %315 = vmatprep.subr.bf16.mxu0 0
    %316 = vmatpush1.bf16.msra.mxu0 %v292
    %317 = vmatprep.subr.bf16.mxu0 0
    %318 = vmatpush1.bf16.msra.mxu0 0
    %319 = vmatprep.subr.bf16.mxu0 0
    %320 = vmatpush1.bf16.msra.mxu0 0
    %321 = vmatprep.subr.bf16.mxu0 0
    %322 = vmatpush1.bf16.msra.mxu0 0
    %323 = vmatprep.subr.bf16.mxu0 0
    %324 = vmatpush1.bf16.msra.mxu0 0
    %325 = vmatprep.subr.bf16.mxu0 0
    %326 = vmatpush1.bf16.msra.mxu0 0
    %327 = vmatprep.subr.bf16.mxu0 0
    %328 = vmatpush1.bf16.msra.mxu0 0
    %329 = vmatprep.subr.bf16.mxu0 0
    %330 = vmatpush1.bf16.msra.mxu0 0
    %331 = vmatprep.subr.bf16.mxu0 0
    %332 = vmatpush1.bf16.msra.mxu0 0
    %333 = vmatprep.mubr.bf16.mxu0 0
    %334 = vmatmul.mubr.bf16.gmra.mrb[0].mxu0 %v246
    %v335 = vpop.f32.mrb[0].mxu0
    %v336 = vadd.f32 %v251, %v335
    %v337 = vpop.f32.mrb[0].mxu0
    %v338 = vpop.f32.mrb[0].mxu0
    %v339 = vpop.f32.mrb[0].mxu0
    %340 = vdwg.mxu0
    %341 = vst [vmem:[#allocation7] sm:$0xff] %v336
    // Predicated region
    $region22: #{fcn_net_forward.1} parent=1 // pred_check
      _
    $region23: #{fcn_net_forward.1} parent=1 // pred_check_branch
      %343 = sbr.rel (0) target = $region25
    $region24: #{fcn_net_forward.1} parent=1 // pred_region
      %s345 = ssub.s32 128, 128
      %346 = vsyncadd [#allocation4], %s345
      %s348 = sshll.u32 [#allocation7], 4
      %s349 = int_to_ptr.vmem [resolvable:$true] %s348
      %351 = dma.vmem_to_hbm [thread:$0]  %s349, 128, %s3, [#allocation4]
    $region25: #{fcn_net_forward.1} parent=1 // pred_fallthru
      _
    // Predicated region
    $region26: #{fcn_net_forward.1} parent=1 // pred_check
      _
    $region27: #{fcn_net_forward.1} parent=1 // pred_check_branch
      %353 = sbr.rel (0) target = $region29
    $region28: #{fcn_net_forward.1} parent=1 // pred_region
      %354 = dma.done [#allocation4], 128
    $region29: #{fcn_net_forward.1} parent=1 // pred_fallthru
      _
    %355 = vsyncpa [#allocation3], 1
    %356 = vsyncpa [#allocation6], 1
    %357 = vsyncpa [#allocation4], 1

</llo_original>
